<compile_context>
chip_gen: v6e
topology: v6e:2x2x1
jax: 0.10.0
libtpu: 0.0.40
codegen_flags: <defaults>
</compile_context>

<pallas_src>
import jax
import jax.numpy as jnp
from jax.experimental import pallas as pl
from jax.experimental.pallas import tpu as pltpu

FC1_UNITS = 128
FC2_UNITS = 64
_MAX_TB = 4096          # batch-tile cap (rows); multiple of 8, VMEM-safe on v7x


def _round_up(x, m):
    return ((x + m - 1) // m) * m


def critic_kernel(state_ref, w1_ref, b1_ref, w2_ref, b2_ref, w3_ref, b3_ref,
                  out_ref):
    """Fused 3-layer MLP on one batch tile: (TB,S) -> (TB,1)."""
    x = state_ref[...]                                          # (TB, S) bf16

    # fc1 + relu : bf16 x bf16 -> f32 accumulate on the MXU, bias/relu in f32.
    h1 = jnp.dot(x, w1_ref[...], preferred_element_type=jnp.float32)
    h1 = jnp.maximum(h1 + b1_ref[...], 0.0)                     # (TB, 128) f32

    # fc2 + relu : cast activations to bf16 for the MXU, keep f32 accumulate.
    h2 = jnp.dot(h1.astype(w2_ref.dtype), w2_ref[...],
                 preferred_element_type=jnp.float32)
    h2 = jnp.maximum(h2 + b2_ref[...], 0.0)                     # (TB, 64) f32

    # fc3 value head (64 -> 1): an N=1 matmul would use a single MXU output
    # lane, so do it as a VPU multiply + XLU lane-reduce instead.
    v = jnp.sum(h2 * w3_ref[...], axis=-1, keepdims=True) + b3_ref[...]

    out_ref[...] = v.astype(out_ref.dtype)                      # (TB, 1)


def critic_forward(state, params):
    """state: (B, state_size) f32. params: dict of transposed weights/biases."""
    B, S = state.shape

    # bf16 inputs for the MXU (halves HBM bytes on the dominant state read).
    state_bf16 = state.astype(jnp.bfloat16)
    w1 = params["w1"].astype(jnp.bfloat16)                      # (S, 128)
    w2 = params["w2"].astype(jnp.bfloat16)                      # (128, 64)
    b1 = params["b1"].astype(jnp.float32)                       # (1, 128)
    b2 = params["b2"].astype(jnp.float32)                       # (1, 64)
    w3_row = params["w3"].reshape(1, FC2_UNITS).astype(jnp.float32)  # (1, 64)
    b3 = params["b3"].astype(jnp.float32)                       # (1, 1)

    # Batch tile: multiple of 8 sublanes, capped so 2x(state tile) + resident
    # weights + f32 intermediates stay far under the scoped VMEM limit on all
    # generations (v5e 16 MiB / v6e 32 MiB / v7x 32 MiB).
    TB = min(_MAX_TB, _round_up(B, 8))
    grid = (pl.cdiv(B, TB),)

    in_specs = [
        pl.BlockSpec((TB, S), lambda i: (i, 0)),        # state: tiled, pipelined
        pl.BlockSpec(w1.shape, lambda i: (0, 0)),       # weights/biases resident
        pl.BlockSpec(b1.shape, lambda i: (0, 0)),
        pl.BlockSpec(w2.shape, lambda i: (0, 0)),
        pl.BlockSpec(b2.shape, lambda i: (0, 0)),
        pl.BlockSpec(w3_row.shape, lambda i: (0, 0)),
        pl.BlockSpec(b3.shape, lambda i: (0, 0)),
    ]
    out_specs = pl.BlockSpec((TB, 1), lambda i: (i, 0))

    # Advisory scheduling hint for XLA around the custom call.
    flops = 2 * B * (S * FC1_UNITS + FC1_UNITS * FC2_UNITS + FC2_UNITS)
    bytes_accessed = (state_bf16.size * 2 + w1.size * 2 + w2.size * 2
                      + (b1.size + b2.size + w3_row.size + b3.size) * 4
                      + B * 4)
    cost = pl.CostEstimate(flops=flops, transcendentals=0,
                           bytes_accessed=bytes_accessed)

    return pl.pallas_call(
        critic_kernel,
        out_shape=jax.ShapeDtypeStruct((B, 1), jnp.float32),
        grid_spec=pltpu.PrefetchScalarGridSpec(
            num_scalar_prefetch=0,
            grid=grid,
            in_specs=in_specs,
            out_specs=out_specs,
        ),
        compiler_params=pltpu.CompilerParams(
            dimension_semantics=("parallel",)),     # shards batch across TCs on v7x
        cost_estimate=cost,
    )(state_bf16, w1, b1, w2, b2, w3_row, b3)


def init_critic_params(key, state_size, fc1_units=FC1_UNITS,
                       fc2_units=FC2_UNITS):
    """Deterministic init mirroring Critic._reset_parameters.

    PyTorch weight shapes are (out, in); we store transposed (in, out).
    fc1/fc2 weights ~ U(-1/sqrt(out_features), ...) per _init_limits (which
    uses weight.size()[0] == out_features); fc3 ~ U(-3e-3, 3e-3).
    Biases are untouched by _reset_parameters, so they keep the nn.Linear
    default U(-1/sqrt(fan_in), 1/sqrt(fan_in)).
    """
    ks = jax.random.split(key, 6)
    u = lambda k, shape, lim: jax.random.uniform(
        k, shape, jnp.float32, minval=-lim, maxval=lim)

    lim1 = 1.0 / jnp.sqrt(float(fc1_units))
    lim2 = 1.0 / jnp.sqrt(float(fc2_units))
    return {
        "w1": u(ks[0], (state_size, fc1_units), lim1),
        "b1": u(ks[1], (1, fc1_units), 1.0 / jnp.sqrt(float(state_size))),
        "w2": u(ks[2], (fc1_units, fc2_units), lim2),
        "b2": u(ks[3], (1, fc2_units), 1.0 / jnp.sqrt(float(fc1_units))),
        "w3": u(ks[4], (fc2_units, 1), 0.003),
        "b3": u(ks[5], (1, 1), 1.0 / jnp.sqrt(float(fc2_units))),
    }


def critic_forward_ref_f32(state, p):
    """Pure-JAX f32 reference (module semantics)."""
    x = jnp.maximum(state @ p["w1"] + p["b1"], 0.0)
    x = jnp.maximum(x @ p["w2"] + p["b2"], 0.0)
    return x @ p["w3"] + p["b3"]


def critic_forward_ref_bf16(state, p):
    """Reference that mirrors the kernel's bf16 MXU inputs / f32 accumulation."""
    rb = lambda a: a.astype(jnp.bfloat16).astype(jnp.float32)
    h1 = jnp.maximum(rb(state) @ rb(p["w1"]) + p["b1"], 0.0)
    h2 = jnp.maximum(rb(h1) @ rb(p["w2"]) + p["b2"], 0.0)
    return h2 @ p["w3"] + p["b3"]


if __name__ == "__main__":
    key = jax.random.PRNGKey(0)
    k_state, k_params = jax.random.split(key)

    batch, state_size = 8, 32
    state = jax.random.normal(k_state, (batch, state_size), jnp.float32)
    params = init_critic_params(k_params, state_size)

    out = critic_forward(state, params)
    out = jax.block_until_ready(out)
    assert out.shape == (batch, 1), out.shape

    # Strict check against a reference using identical bf16-rounded MXU inputs.
    ref_bf16 = critic_forward_ref_bf16(state, params)
    assert jnp.allclose(out, ref_bf16, atol=1e-4, rtol=1e-4), (
        "mismatch vs bf16-input reference")

    # Loose check against the exact f32 module semantics (bf16 input rounding
    # only perturbs the value head by O(1e-3)).
    ref_f32 = critic_forward_ref_f32(state, params)
    assert jnp.allclose(out, ref_f32, atol=1e-2, rtol=1e-2), (
        "mismatch vs f32 reference")

    print("KERNEL_OK")
</pallas_src>

<mosaic_0001>
module attributes {stable_mosaic.version = 11 : i64} {
  func.func @critic_kernel(%arg0: i32, %arg1: memref<8x32xbf16, #tpu.memory_space<vmem>>, %arg2: memref<32x128xbf16, #tpu.memory_space<vmem>>, %arg3: memref<1x128xf32, #tpu.memory_space<vmem>>, %arg4: memref<128x64xbf16, #tpu.memory_space<vmem>>, %arg5: memref<1x64xf32, #tpu.memory_space<vmem>>, %arg6: memref<1x64xf32, #tpu.memory_space<vmem>>, %arg7: memref<1x1xf32, #tpu.memory_space<vmem>>, %arg8: memref<8x1xf32, #tpu.memory_space<vmem>>) attributes {dimension_semantics = [#tpu.dimension_semantics<parallel>], iteration_bounds = array<i64: 1>, scalar_prefetch = 0 : i64, scratch_operands = 0 : i64, tpu.core_type = #tpu.core_type<tc>, window_params = [{transform_indices = @transform_0, window_bounds = array<i64: 8, 32>}, {pipeline_mode = #tpu.pipeline_mode<synchronous>, transform_indices = @transform_1, window_bounds = array<i64: 32, 128>}, {pipeline_mode = #tpu.pipeline_mode<synchronous>, transform_indices = @transform_2, window_bounds = array<i64: 1, 128>}, {pipeline_mode = #tpu.pipeline_mode<synchronous>, transform_indices = @transform_3, window_bounds = array<i64: 128, 64>}, {pipeline_mode = #tpu.pipeline_mode<synchronous>, transform_indices = @transform_4, window_bounds = array<i64: 1, 64>}, {pipeline_mode = #tpu.pipeline_mode<synchronous>, transform_indices = @transform_5, window_bounds = array<i64: 1, 64>}, {pipeline_mode = #tpu.pipeline_mode<synchronous>, transform_indices = @transform_6, window_bounds = array<i64: 1, 1>}, {transform_indices = @transform_7, window_bounds = array<i64: 8, 1>}]} {
    %c0 = arith.constant 0 : index
    %c0_0 = arith.constant 0 : index
    %0 = vector.load %arg1[%c0, %c0_0] : memref<8x32xbf16, #tpu.memory_space<vmem>>, vector<8x32xbf16>
    %c0_1 = arith.constant 0 : index
    %c0_2 = arith.constant 0 : index
    %1 = vector.load %arg2[%c0_1, %c0_2] : memref<32x128xbf16, #tpu.memory_space<vmem>>, vector<32x128xbf16>
    %cst = arith.constant dense<0.000000e+00> : vector<8x128xf32>
    %2 = tpu.matmul %0, %1, %cst {dimension_numbers = #tpu.dot_dimension_numbers<[1], [0], [0], [1], [0, 0, 1, 1], [], []>} : vector<8x32xbf16>, vector<32x128xbf16>, vector<8x128xf32> -> vector<8x128xf32>
    %c0_3 = arith.constant 0 : index
    %c0_4 = arith.constant 0 : index
    %3 = vector.load %arg3[%c0_3, %c0_4] : memref<1x128xf32, #tpu.memory_space<vmem>>, vector<1x128xf32>
    %4 = vector.broadcast %3 : vector<1x128xf32> to vector<8x128xf32>
    %5 = arith.addf %2, %4 : vector<8x128xf32>
    %cst_5 = arith.constant 0.000000e+00 : f32
    %6 = vector.broadcast %cst_5 : f32 to vector<8x128xf32>
    %7 = arith.maximumf %5, %6 : vector<8x128xf32>
    %8 = arith.truncf %7 : vector<8x128xf32> to vector<8x128xbf16>
    %c0_6 = arith.constant 0 : index
    %c0_7 = arith.constant 0 : index
    %9 = vector.load %arg4[%c0_6, %c0_7] : memref<128x64xbf16, #tpu.memory_space<vmem>>, vector<128x64xbf16>
    %cst_8 = arith.constant dense<0.000000e+00> : vector<8x64xf32>
    %10 = tpu.matmul %8, %9, %cst_8 {dimension_numbers = #tpu.dot_dimension_numbers<[1], [0], [0], [1], [0, 0, 1, 1], [], []>} : vector<8x128xbf16>, vector<128x64xbf16>, vector<8x64xf32> -> vector<8x64xf32>
    %c0_9 = arith.constant 0 : index
    %c0_10 = arith.constant 0 : index
    %11 = vector.load %arg5[%c0_9, %c0_10] : memref<1x64xf32, #tpu.memory_space<vmem>>, vector<1x64xf32>
    %12 = vector.broadcast %11 : vector<1x64xf32> to vector<8x64xf32>
    %13 = arith.addf %10, %12 : vector<8x64xf32>
    %cst_11 = arith.constant 0.000000e+00 : f32
    %14 = vector.broadcast %cst_11 : f32 to vector<8x64xf32>
    %15 = arith.maximumf %13, %14 : vector<8x64xf32>
    %c0_12 = arith.constant 0 : index
    %c0_13 = arith.constant 0 : index
    %16 = vector.load %arg6[%c0_12, %c0_13] : memref<1x64xf32, #tpu.memory_space<vmem>>, vector<1x64xf32>
    %17 = vector.broadcast %16 : vector<1x64xf32> to vector<8x64xf32>
    %18 = arith.mulf %15, %17 : vector<8x64xf32>
    %cst_14 = arith.constant dense<0.000000e+00> : vector<8xf32>
    %19 = vector.multi_reduction <add>, %18, %cst_14 [1] : vector<8x64xf32> to vector<8xf32>
    %20 = vector.shape_cast %19 : vector<8xf32> to vector<8x1xf32>
    %c0_15 = arith.constant 0 : index
    %c0_16 = arith.constant 0 : index
    %21 = vector.load %arg7[%c0_15, %c0_16] : memref<1x1xf32, #tpu.memory_space<vmem>>, vector<1x1xf32>
    %22 = vector.broadcast %21 : vector<1x1xf32> to vector<8x1xf32>
    %23 = arith.addf %20, %22 : vector<8x1xf32>
    %c0_17 = arith.constant 0 : index
    %c0_18 = arith.constant 0 : index
    %24 = vector.load %arg8[%c0_17, %c0_18] : memref<8x1xf32, #tpu.memory_space<vmem>>, vector<8x1xf32>
    tpu.vector_store %arg8[%c0_17, %c0_18], %23 {strides = array<i32>} : memref<8x1xf32, #tpu.memory_space<vmem>>, vector<8x1xf32>,
    return
  }
  func.func @transform_0(%arg0: i32) -> (i32, i32) {
    %c0_i32 = arith.constant 0 : i32
    %c0_i32_0 = arith.constant 0 : i32
    return %arg0, %c0_i32 : i32, i32
  }
  func.func @transform_1(%arg0: i32) -> (i32, i32) {
    %c0_i32 = arith.constant 0 : i32
    %c0_i32_0 = arith.constant 0 : i32
    %c0_i32_1 = arith.constant 0 : i32
    return %c0_i32, %c0_i32_0 : i32, i32
  }
  func.func @transform_2(%arg0: i32) -> (i32, i32) {
    %c0_i32 = arith.constant 0 : i32
    %c0_i32_0 = arith.constant 0 : i32
    %c0_i32_1 = arith.constant 0 : i32
    return %c0_i32, %c0_i32_0 : i32, i32
  }
  func.func @transform_3(%arg0: i32) -> (i32, i32) {
    %c0_i32 = arith.constant 0 : i32
    %c0_i32_0 = arith.constant 0 : i32
    %c0_i32_1 = arith.constant 0 : i32
    return %c0_i32, %c0_i32_0 : i32, i32
  }
  func.func @transform_4(%arg0: i32) -> (i32, i32) {
    %c0_i32 = arith.constant 0 : i32
    %c0_i32_0 = arith.constant 0 : i32
    %c0_i32_1 = arith.constant 0 : i32
    return %c0_i32, %c0_i32_0 : i32, i32
  }
  func.func @transform_5(%arg0: i32) -> (i32, i32) {
    %c0_i32 = arith.constant 0 : i32
    %c0_i32_0 = arith.constant 0 : i32
    %c0_i32_1 = arith.constant 0 : i32
    return %c0_i32, %c0_i32_0 : i32, i32
  }
  func.func @transform_6(%arg0: i32) -> (i32, i32) {
    %c0_i32 = arith.constant 0 : i32
    %c0_i32_0 = arith.constant 0 : i32
    %c0_i32_1 = arith.constant 0 : i32
    return %c0_i32, %c0_i32_0 : i32, i32
  }
  func.func @transform_7(%arg0: i32) -> (i32, i32) {
    %c0_i32 = arith.constant 0 : i32
    %c0_i32_0 = arith.constant 0 : i32
    return %arg0, %c0_i32 : i32, i32
  }
}

</mosaic_0001>

<llo_original>
// kernel: tpu_custom_call.1
$region0: #{tpu_custom_call.1}
  #allocation0 [shape = 'u32[]', space=smem, size = 0x4, offset = 0x4, fixed_abs, tag = 'smem constant byte address 0x4 - core index']
  #allocation1 [shape = 'u32[144,128]{1,0:T(1,128)}', space=vmem, size = 0x12000, scoped, tag = 'internal scratch']
  #allocation2 [shape = 'f32[1,1]{1,0:T(1,128)S(1)}', space=vmem, size = 0x200, scoped, tag = 'scoped memory for tpu_custom_call.1']
  %s0 = inlined_call_operand.vmem [shape: bf16[8,32], index: 0, kind: input, shape index: {}]
  %s1 = inlined_call_operand.vmem [shape: bf16[32,128], index: 1, kind: input, shape index: {}]
  %s2 = inlined_call_operand.vmem [shape: f32[1,128], index: 2, kind: input, shape index: {}]
  %s3 = inlined_call_operand.vmem [shape: bf16[128,64], index: 3, kind: input, shape index: {}]
  %s4 = inlined_call_operand.vmem [shape: f32[1,64], index: 4, kind: input, shape index: {}]
  %s5 = inlined_call_operand.vmem [shape: f32[1,64], index: 5, kind: input, shape index: {}]
  %s6 = inlined_call_operand.<no memory space> [shape: f32[1,1], index: 6, kind: input, shape index: {}]
  %s7 = inlined_call_operand.vmem [shape: f32[8,1], index: 7, kind: output, shape index: {}]
  %s8 = sld [smem:[#allocation0]]
  $region38: #{tpu_custom_call.1} parent=0
    _
  %s10 = ssub.s32 1, %s8
  %s11 = scalar_select 0, %s10, %s8
  %v12 = vstv %s6
  %13 = vst [vmem:[#allocation2] sm:$0x1] %v12
  // Predicated region
  $region2: #{tpu_custom_call.1} parent=0 // pred_check
    _
  $region3: #{tpu_custom_call.1} parent=0 // pred_check_branch
    %15 = sbr.rel (0) target = $region5
  $region4: #{tpu_custom_call.1} parent=0 // pred_region
    _
  $region5: #{tpu_custom_call.1} parent=0 // pred_fallthru
    _
  // Predicated region
  $region6: #{tpu_custom_call.1} parent=0 // pred_check
    _
  $region7: #{tpu_custom_call.1} parent=0 // pred_check_branch
    %17 = sbr.rel (0) target = $region9
  $region8: #{tpu_custom_call.1} parent=0 // pred_region
    _
  $region9: #{tpu_custom_call.1} parent=0 // pred_fallthru
    _
  // Predicated region
  $region10: #{tpu_custom_call.1} parent=0 // pred_check
    _
  $region11: #{tpu_custom_call.1} parent=0 // pred_check_branch
    %19 = sbr.rel (0) target = $region13
  $region12: #{tpu_custom_call.1} parent=0 // pred_region
    _
  $region13: #{tpu_custom_call.1} parent=0 // pred_fallthru
    _
  // Predicated region
  $region14: #{tpu_custom_call.1} parent=0 // pred_check
    _
  $region15: #{tpu_custom_call.1} parent=0 // pred_check_branch
    %21 = sbr.rel (0) target = $region17
  $region16: #{tpu_custom_call.1} parent=0 // pred_region
    _
  $region17: #{tpu_custom_call.1} parent=0 // pred_fallthru
    _
  // Predicated region
  $region18: #{tpu_custom_call.1} parent=0 // pred_check
    _
  $region19: #{tpu_custom_call.1} parent=0 // pred_check_branch
    %23 = sbr.rel (0) target = $region21
  $region20: #{tpu_custom_call.1} parent=0 // pred_region
    _
  $region21: #{tpu_custom_call.1} parent=0 // pred_fallthru
    _
  // Predicated region
  $region22: #{tpu_custom_call.1} parent=0 // pred_check
    _
  $region23: #{tpu_custom_call.1} parent=0 // pred_check_branch
    %25 = sbr.rel (0) target = $region25
  $region24: #{tpu_custom_call.1} parent=0 // pred_region
    _
  $region25: #{tpu_custom_call.1} parent=0 // pred_fallthru
    _
  // Predicated region
  $region26: #{tpu_custom_call.1} parent=0 // pred_check
    _
  $region27: #{tpu_custom_call.1} parent=0 // pred_check_branch
    %27 = sbr.rel (0) target = $region29
  $region28: #{tpu_custom_call.1} parent=0 // pred_region
    _
  $region29: #{tpu_custom_call.1} parent=0 // pred_fallthru
    _
  %v29 = vld [vmem:[%s0] sm:$0xf]
  %v30 = vld [vmem:[%s1] sm:$0xf]
  %v31 = vld [vmem:[%s1 + $0x4] sm:$0xf]
  %v32 = vld [vmem:[%s1 + $0x8] sm:$0xf]
  %v33 = vld [vmem:[%s1 + $0xc] sm:$0xf]
  %v34 = vld [vmem:[%s2] sm:$0x1]
  %v36 = vlaneseq
  %v37 = vshrl.u32 %v36, 7
  %v38 = vsub.s32 0, %v37
  %v39 = vrot.slane %v34, %v38
  %v45 = vunpack.c.l.b16 %v30
  %v46 = vunpack.c.l.b16 %v31
  %v47 = vunpack.c.l.b16 %v32
  %v48 = vunpack.c.l.b16 %v33
  %v49 = vpack.c.b16 %v46, %v45
  %v50 = vpack.c.b16 %v48, %v47
  %vm53 = vcmask 261120
  %v55 = vsel %vm53, %v29, 0
  %57 = vmatprep.subr.bf16.mxu0 0
  %58 = vmatpush1.bf16.msra.mxu0 0
  %59 = vmatprep.subr.bf16.mxu0 0
  %60 = vmatpush1.bf16.msra.mxu0 0
  %61 = vmatprep.subr.bf16.mxu0 0
  %62 = vmatpush1.bf16.msra.mxu0 0
  %63 = vmatprep.subr.bf16.mxu0 0
  %64 = vmatpush1.bf16.msra.mxu0 0
  %65 = vmatprep.subr.bf16.mxu0 0
  %66 = vmatpush1.bf16.msra.mxu0 0
  %67 = vmatprep.subr.bf16.mxu0 0
  %68 = vmatpush1.bf16.msra.mxu0 0
  %69 = vmatprep.subr.bf16.mxu0 0
  %70 = vmatpush1.bf16.msra.mxu0 %v50
  %71 = vmatprep.subr.bf16.mxu0 0
  %72 = vmatpush1.bf16.msra.mxu0 %v49
  %73 = vmatprep.subr.bf16.mxu0 0
  %74 = vmatpush2.bf16.msra.mxu0 0
  %75 = vmatprep.subr.bf16.mxu0 0
  %76 = vmatpush2.bf16.msra.mxu0 0
  %77 = vmatprep.subr.bf16.mxu0 0
  %78 = vmatpush2.bf16.msra.mxu0 0
  %79 = vmatprep.subr.bf16.mxu0 0
  %80 = vmatpush2.bf16.msra.mxu0 0
  %81 = vmatprep.subr.bf16.mxu0 0
  %82 = vmatpush2.bf16.msra.mxu0 0
  %83 = vmatprep.subr.bf16.mxu0 0
  %84 = vmatpush2.bf16.msra.mxu0 0
  %85 = vmatprep.subr.bf16.mxu0 0
  %86 = vmatpush2.bf16.msra.mxu0 0
  %87 = vmatprep.subr.bf16.mxu0 0
  %88 = vmatpush2.bf16.msra.mxu0 0
  %89 = vmatprep.mubr.bf16.mxu0 0
  %90 = vmatmul.mubr.bf16.gmra.mxu0 %v55
  %v91 = vpop.f32.mrf.mxu0
  %v92 = vadd.f32 %v39, %v91
  %v93 = vpop.f32.mrf.mxu0
  %v94 = vpop.f32.mrf.mxu0
  %v95 = vpop.f32.mrf.mxu0
  %96 = vdwg.mxu0
  %v97 = vmax.f32 %v92, 0.0
  %v98 = vpack.c.bf16 %v97, %v97
  %v99 = vld [vmem:[%s3] sm:$0xf]
  %v100 = vld [vmem:[%s3 + $0x4] sm:$0xf]
  %v101 = vld [vmem:[%s3 + $0x8] sm:$0xf]
  %v102 = vld [vmem:[%s3 + $0xc] sm:$0xf]
  %v103 = vld [vmem:[%s3 + $0x10] sm:$0xf]
  %v104 = vld [vmem:[%s3 + $0x14] sm:$0xf]
  %v105 = vld [vmem:[%s3 + $0x18] sm:$0xf]
  %v106 = vld [vmem:[%s3 + $0x1c] sm:$0xf]
  %v107 = vld [vmem:[%s3 + $0x20] sm:$0xf]
  %v108 = vld [vmem:[%s3 + $0x24] sm:$0xf]
  %v109 = vld [vmem:[%s3 + $0x28] sm:$0xf]
  %v110 = vld [vmem:[%s3 + $0x2c] sm:$0xf]
  %v111 = vld [vmem:[%s3 + $0x30] sm:$0xf]
  %v112 = vld [vmem:[%s3 + $0x34] sm:$0xf]
  %v113 = vld [vmem:[%s3 + $0x38] sm:$0xf]
  %v114 = vld [vmem:[%s3 + $0x3c] sm:$0xf]
  %v115 = vld [vmem:[%s4] sm:$0x1]
  %v117 = vlaneseq
  %v118 = vshrl.u32 %v117, 7
  %v119 = vsub.s32 0, %v118
  %v120 = vrot.slane %v115, %v119
  %v138 = vunpack.c.l.b16 %v99
  %v139 = vunpack.c.l.b16 %v100
  %v140 = vunpack.c.l.b16 %v101
  %v141 = vunpack.c.l.b16 %v102
  %v142 = vunpack.c.l.b16 %v103
  %v143 = vunpack.c.l.b16 %v104
  %v144 = vunpack.c.l.b16 %v105
  %v145 = vunpack.c.l.b16 %v106
  %v146 = vunpack.c.l.b16 %v107
  %v147 = vunpack.c.l.b16 %v108
  %v148 = vunpack.c.l.b16 %v109
  %v149 = vunpack.c.l.b16 %v110
  %v150 = vunpack.c.l.b16 %v111
  %v151 = vunpack.c.l.b16 %v112
  %v152 = vunpack.c.l.b16 %v113
  %v153 = vunpack.c.l.b16 %v114
  %v154 = vpack.c.b16 %v139, %v138
  %v155 = vpack.c.b16 %v141, %v140
  %v156 = vpack.c.b16 %v143, %v142
  %v157 = vpack.c.b16 %v145, %v144
  %v158 = vpack.c.b16 %v147, %v146
  %v159 = vpack.c.b16 %v149, %v148
  %v160 = vpack.c.b16 %v151, %v150
  %v161 = vpack.c.b16 %v153, %v152
  %170 = vmatprep.subr.bf16.mxu0 0
  %171 = vmatpush1.bf16.msra.mxu0 %v161
  %172 = vmatprep.subr.bf16.mxu0 0
  %173 = vmatpush1.bf16.msra.mxu0 %v160
  %174 = vmatprep.subr.bf16.mxu0 0
  %175 = vmatpush1.bf16.msra.mxu0 %v159
  %176 = vmatprep.subr.bf16.mxu0 0
  %177 = vmatpush1.bf16.msra.mxu0 %v158
  %178 = vmatprep.subr.bf16.mxu0 0
  %179 = vmatpush1.bf16.msra.mxu0 %v157
  %180 = vmatprep.subr.bf16.mxu0 0
  %181 = vmatpush1.bf16.msra.mxu0 %v156
  %182 = vmatprep.subr.bf16.mxu0 0
  %183 = vmatpush1.bf16.msra.mxu0 %v155
  %184 = vmatprep.subr.bf16.mxu0 0
  %185 = vmatpush1.bf16.msra.mxu0 %v154
  %186 = vmatprep.subr.bf16.mxu0 0
  %187 = vmatpush2.bf16.msra.mxu0 0
  %188 = vmatprep.subr.bf16.mxu0 0
  %189 = vmatpush2.bf16.msra.mxu0 0
  %190 = vmatprep.subr.bf16.mxu0 0
  %191 = vmatpush2.bf16.msra.mxu0 0
  %192 = vmatprep.subr.bf16.mxu0 0
  %193 = vmatpush2.bf16.msra.mxu0 0
  %194 = vmatprep.subr.bf16.mxu0 0
  %195 = vmatpush2.bf16.msra.mxu0 0
  %196 = vmatprep.subr.bf16.mxu0 0
  %197 = vmatpush2.bf16.msra.mxu0 0
  %198 = vmatprep.subr.bf16.mxu0 0
  %199 = vmatpush2.bf16.msra.mxu0 0
  %200 = vmatprep.subr.bf16.mxu0 0
  %201 = vmatpush2.bf16.msra.mxu0 0
  %202 = vmatprep.mubr.bf16.mxu0 0
  %203 = vmatmul.mubr.bf16.gmra.mxu0 %v98
  %v204 = vpop.f32.mrf.mxu0
  %v205 = vadd.f32 %v120, %v204
  %v206 = vpop.f32.mrf.mxu0
  %v207 = vpop.f32.mrf.mxu0
  %v208 = vpop.f32.mrf.mxu0
  %209 = vdwg.mxu0
  %v210 = vmax.f32 %v205, 0.0
  %v211 = vld [vmem:[%s5] sm:$0x1]
  %v213 = vlaneseq
  %v214 = vshrl.u32 %v213, 7
  %v215 = vsub.s32 0, %v214
  %v216 = vrot.slane %v211, %v215
  %v218 = vmul.f32 %v210, %v216
  %vm219 = vcmask 523264
  %v220 = vsel %vm219, %v218, 0.0
  %221 = vadd.xlane.f32.xlu0 %v220
  %v222 = vpop.xlane.xlu0 %221
  %v223 = vld [vmem:[#allocation2] sm:$0x1]
  %v225 = vlaneseq
  %v226 = vshrl.u32 %v225, 7
  %v227 = vsub.s32 0, %v226
  %v228 = vrot.slane %v223, %v227
  %v230 = vadd.f32 %v222, %v228
  %vm231 = vcmask 7168
  %232 = vst.msk [vmem:[%s7] sm:$0xff] %vm231, %v230
  // Predicated region
  $region30: #{tpu_custom_call.1} parent=0 // pred_check
    _
  $region31: #{tpu_custom_call.1} parent=0 // pred_check_branch
    %234 = sbr.rel (0) target = $region33
  $region32: #{tpu_custom_call.1} parent=0 // pred_region
    _
  $region33: #{tpu_custom_call.1} parent=0 // pred_fallthru
    _
  // Predicated region
  $region34: #{tpu_custom_call.1} parent=0 // pred_check
    _
  $region35: #{tpu_custom_call.1} parent=0 // pred_check_branch
    %236 = sbr.rel (0) target = $region37
  $region36: #{tpu_custom_call.1} parent=0 // pred_region
    _
  $region37: #{tpu_custom_call.1} parent=0 // pred_fallthru
    _

</llo_original>
